<compile_context>
chip_gen: v5e
topology: v5e:2x2
jax: 0.10.0
libtpu: 0.0.40
codegen_flags: <defaults>
</compile_context>

<pallas_src>
import jax
import jax.numpy as jnp
from jax.experimental import pallas as pl
from jax.experimental.pallas import tpu as pltpu


# ---------------------------------------------------------------------------
# Pass 1: streaming per-channel sum / sum-of-squares (BatchNorm batch stats).
# ---------------------------------------------------------------------------
def _stats_kernel(p_ref, w_ref, sum_ref, sumsq_ref):
    # p_ref:     (tile_m, K)      bf16 im2col patch tile
    # w_ref:     (K, Cout_pad)    bf16 conv weight matrix (resident)
    # sum_ref:   (1, Cout_pad)    f32 accumulator (same block every grid step)
    # sumsq_ref: (1, Cout_pad)    f32 accumulator
    @pl.when(pl.program_id(0) == 0)
    def _():
        sum_ref[...] = jnp.zeros_like(sum_ref)
        sumsq_ref[...] = jnp.zeros_like(sumsq_ref)

    y = jnp.dot(p_ref[...], w_ref[...], preferred_element_type=jnp.float32)
    sum_ref[...] += jnp.sum(y, axis=0, keepdims=True)
    sumsq_ref[...] += jnp.sum(y * y, axis=0, keepdims=True)


# ---------------------------------------------------------------------------
# Pass 2: matmul + folded BN scale/shift + CReLU as two lane-dense outputs.
# ---------------------------------------------------------------------------
def _norm_crelu_kernel(p_ref, w_ref, scale_ref, shift_ref, pos_ref, neg_ref):
    # relu(cat(y, -y)) == cat(relu(y), relu(-y)) -> two direct writes, no concat.
    y = jnp.dot(p_ref[...], w_ref[...], preferred_element_type=jnp.float32)
    y = y * scale_ref[...] + shift_ref[...]
    pos_ref[...] = jnp.maximum(y, 0.0).astype(pos_ref.dtype)
    neg_ref[...] = jnp.maximum(-y, 0.0).astype(neg_ref.dtype)


# ---------------------------------------------------------------------------
# Host-side glue.
# ---------------------------------------------------------------------------
def _im2col_nhwc(x, kh, kw, stride, pad):
    """Extract conv patches (plain JAX data reshuffling, no heavy compute)."""
    N, H, W, C = x.shape
    xp = jnp.pad(x, ((0, 0), (pad, pad), (pad, pad), (0, 0)))
    Ho = (H + 2 * pad - kh) // stride + 1
    Wo = (W + 2 * pad - kw) // stride + 1
    cols = []
    for i in range(kh):
        for j in range(kw):
            cols.append(xp[:, i:i + Ho * stride:stride, j:j + Wo * stride:stride, :])
    patches = jnp.concatenate(cols, axis=-1)              # (N, Ho, Wo, kh*kw*C)
    return patches.reshape(N * Ho * Wo, kh * kw * C), Ho, Wo


def _round_up(x, m):
    return (x + m - 1) // m * m


def _choose_tile_m(m):
    # ~1024 rows/tile fits comfortably in the 32 MiB scoped-VMEM default on all
    # of v5e/v6e/v7x even with double buffering (bf16 patches + two padded f32
    # output tiles + resident weights is ~2-3 MiB). Shrink for small problems
    # so the pipelined / streaming-BN path is still exercised.
    tile = 1024
    while tile > 8 and tile >= m:
        tile //= 2
    return max(tile, 8)


def crelu_forward(x_nchw, weight_oihw, gamma, beta, stride=1, pad=1, eps=1e-5):
    N, Cin, H, W = x_nchw.shape
    Cout, _, KH, KW = weight_oihw.shape

    x_nhwc = jnp.transpose(x_nchw, (0, 2, 3, 1))
    patches, Ho, Wo = _im2col_nhwc(x_nhwc, KH, KW, stride, pad)
    M, K = patches.shape

    # Pad channels to a full 128-lane vreg (lane-dense stores, unmasked vst)
    # and pad M to a whole number of tiles. Zero-padded rows/columns contribute
    # nothing to the streaming sums; we divide by the real M below.
    cout_pad = _round_up(max(Cout, 128), 128)
    tile_m = _choose_tile_m(M)
    m_pad = _round_up(M, tile_m)
    num_tiles = m_pad // tile_m

    patches_bf16 = jnp.pad(patches, ((0, m_pad - M), (0, 0))).astype(jnp.bfloat16)

    # PyTorch conv weight (Cout, Cin, KH, KW) -> (KH*KW*Cin, Cout) matrix with
    # the (i, j, c_in) ordering produced by _im2col_nhwc, zero-padded on Cout.
    w_mat = jnp.transpose(weight_oihw, (2, 3, 1, 0)).reshape(KH * KW * Cin, Cout)
    w_mat = jnp.pad(w_mat, ((0, 0), (0, cout_pad - Cout))).astype(jnp.bfloat16)

    gamma_p = jnp.pad(gamma.astype(jnp.float32), (0, cout_pad - Cout)).reshape(1, cout_pad)
    beta_p = jnp.pad(beta.astype(jnp.float32), (0, cout_pad - Cout)).reshape(1, cout_pad)

    # ---- Pass 1: streaming per-channel sum / sum-of-squares over all rows ----
    ch_sum, ch_sumsq = pl.pallas_call(
        _stats_kernel,
        out_shape=(
            jax.ShapeDtypeStruct((1, cout_pad), jnp.float32),
            jax.ShapeDtypeStruct((1, cout_pad), jnp.float32),
        ),
        grid_spec=pltpu.PrefetchScalarGridSpec(
            num_scalar_prefetch=0,
            grid=(num_tiles,),
            in_specs=[
                pl.BlockSpec((tile_m, K), lambda i: (i, 0)),
                pl.BlockSpec((K, cout_pad), lambda i: (0, 0)),
            ],
            out_specs=[
                pl.BlockSpec((1, cout_pad), lambda i: (0, 0)),
                pl.BlockSpec((1, cout_pad), lambda i: (0, 0)),
            ],
        ),
        compiler_params=pltpu.CompilerParams(dimension_semantics=("arbitrary",)),
    )(patches_bf16, w_mat)

    # Fold batch statistics (biased variance, eps=1e-5 -> PyTorch training-mode
    # forward) together with gamma/beta into one per-channel scale & shift.
    inv_m = 1.0 / float(M)
    mean = ch_sum * inv_m
    var = jnp.maximum(ch_sumsq * inv_m - mean * mean, 0.0)
    scale = gamma_p * jax.lax.rsqrt(var + eps)
    shift = beta_p - mean * scale

    # ---- Pass 2: matmul + scale/shift + CReLU, tiled and megacore-parallel ----
    pos, neg = pl.pallas_call(
        _norm_crelu_kernel,
        out_shape=(
            jax.ShapeDtypeStruct((m_pad, cout_pad), x_nchw.dtype),
            jax.ShapeDtypeStruct((m_pad, cout_pad), x_nchw.dtype),
        ),
        grid_spec=pltpu.PrefetchScalarGridSpec(
            num_scalar_prefetch=0,
            grid=(num_tiles,),
            in_specs=[
                pl.BlockSpec((tile_m, K), lambda i: (i, 0)),
                pl.BlockSpec((K, cout_pad), lambda i: (0, 0)),
                pl.BlockSpec((1, cout_pad), lambda i: (0, 0)),
                pl.BlockSpec((1, cout_pad), lambda i: (0, 0)),
            ],
            out_specs=[
                pl.BlockSpec((tile_m, cout_pad), lambda i: (i, 0)),
                pl.BlockSpec((tile_m, cout_pad), lambda i: (i, 0)),
            ],
        ),
        compiler_params=pltpu.CompilerParams(dimension_semantics=("parallel",)),
    )(patches_bf16, w_mat, scale, shift)

    # Strip padding, interleave [relu(y), relu(-y)] along channels, go NCHW.
    pos = pos[:M, :Cout].reshape(N, Ho, Wo, Cout)
    neg = neg[:M, :Cout].reshape(N, Ho, Wo, Cout)
    out_nhwc = jnp.concatenate([pos, neg], axis=-1)
    return jnp.transpose(out_nhwc, (0, 3, 1, 2))   # (N, 2*Cout, Ho, Wo)


# ---------------------------------------------------------------------------
# Pure-JAX reference mirroring the PyTorch module (f32 end-to-end).
# ---------------------------------------------------------------------------
def _crelu_reference(x, w, gamma, beta, stride, pad, eps=1e-5):
    y = jax.lax.conv_general_dilated(
        x, w, window_strides=(stride, stride),
        padding=((pad, pad), (pad, pad)),
        dimension_numbers=("NCHW", "OIHW", "NCHW"))
    mean = jnp.mean(y, axis=(0, 2, 3), keepdims=True)
    var = jnp.mean((y - mean) ** 2, axis=(0, 2, 3), keepdims=True)
    yhat = (y - mean) * jax.lax.rsqrt(var + eps)
    yhat = yhat * gamma.reshape(1, -1, 1, 1) + beta.reshape(1, -1, 1, 1)
    return jnp.maximum(jnp.concatenate([yhat, -yhat], axis=1), 0.0)


if __name__ == "__main__":
    key = jax.random.PRNGKey(0)
    kw_key, kg_key, kx_key = jax.random.split(key, 3)

    # Small shapes consistent with CRelu(in_channels=4, out_channels=8,
    # kernel_size=3, stride=1, padding=1).
    N, Cin, H, W = 2, 4, 16, 16
    Cout, KH, KW = 8, 3, 3

    x = jax.random.normal(kx_key, (N, Cin, H, W), dtype=jnp.float32)
    weight = 0.1 * jax.random.normal(kw_key, (Cout, Cin, KH, KW), dtype=jnp.float32)
    gamma = 1.0 + 0.1 * jax.random.normal(kg_key, (Cout,), dtype=jnp.float32)
    beta = jnp.linspace(-0.2, 0.2, Cout, dtype=jnp.float32)

    out = crelu_forward(x, weight, gamma, beta, stride=1, pad=1)
    out = jax.block_until_ready(out)
    assert out.shape == (N, 2 * Cout, H, W), out.shape
    assert bool(jnp.all(out >= 0.0))  # ReLU post-condition

    # Correctness vs f32 reference (loose tolerance: MXU operands are bf16).
    ref = _crelu_reference(x, weight, gamma, beta, stride=1, pad=1)
    assert bool(jnp.allclose(out, ref, atol=5e-2, rtol=5e-2)), float(
        jnp.max(jnp.abs(out - ref)))

    print("KERNEL_OK")
</pallas_src>

<mosaic_0001>
module attributes {stable_mosaic.version = 11 : i64} {
  func.func @_stats_kernel(%arg0: i32, %arg1: memref<256x36xbf16, #tpu.memory_space<vmem>>, %arg2: memref<36x128xbf16, #tpu.memory_space<vmem>>, %arg3: memref<1x128xf32, #tpu.memory_space<vmem>>, %arg4: memref<1x128xf32, #tpu.memory_space<vmem>>) attributes {dimension_semantics = [#tpu.dimension_semantics<arbitrary>], iteration_bounds = array<i64: 2>, scalar_prefetch = 0 : i64, scratch_operands = 0 : i64, tpu.core_type = #tpu.core_type<tc>, window_params = [{transform_indices = @transform_0, window_bounds = array<i64: 256, 36>}, {pipeline_mode = #tpu.pipeline_mode<synchronous>, transform_indices = @transform_1, window_bounds = array<i64: 36, 128>}, {pipeline_mode = #tpu.pipeline_mode<synchronous>, transform_indices = @transform_2, window_bounds = array<i64: 1, 128>}, {pipeline_mode = #tpu.pipeline_mode<synchronous>, transform_indices = @transform_3, window_bounds = array<i64: 1, 128>}]} {
    %c0_i32 = arith.constant 0 : i32
    %0 = arith.cmpi eq, %arg0, %c0_i32 : i32
    %1 = arith.extui %0 : i1 to i32
    %c0_i32_0 = arith.constant 0 : i32
    %2 = arith.cmpi ne, %1, %c0_i32_0 : i32
    scf.if %2 {
      %cst_14 = arith.constant 0.000000e+00 : f32
      %17 = vector.broadcast %cst_14 : f32 to vector<1x128xf32>
      %c0_15 = arith.constant 0 : index
      %c0_16 = arith.constant 0 : index
      %18 = vector.load %arg3[%c0_15, %c0_16] : memref<1x128xf32, #tpu.memory_space<vmem>>, vector<1x128xf32>
      tpu.vector_store %arg3[%c0_15, %c0_16], %17 {strides = array<i32>} : memref<1x128xf32, #tpu.memory_space<vmem>>, vector<1x128xf32>,
      %cst_17 = arith.constant 0.000000e+00 : f32
      %19 = vector.broadcast %cst_17 : f32 to vector<1x128xf32>
      %c0_18 = arith.constant 0 : index
      %c0_19 = arith.constant 0 : index
      %20 = vector.load %arg4[%c0_18, %c0_19] : memref<1x128xf32, #tpu.memory_space<vmem>>, vector<1x128xf32>
      tpu.vector_store %arg4[%c0_18, %c0_19], %19 {strides = array<i32>} : memref<1x128xf32, #tpu.memory_space<vmem>>, vector<1x128xf32>,
    } else {
    }
    %c0 = arith.constant 0 : index
    %c0_1 = arith.constant 0 : index
    %3 = vector.load %arg1[%c0, %c0_1] : memref<256x36xbf16, #tpu.memory_space<vmem>>, vector<256x36xbf16>
    %c0_2 = arith.constant 0 : index
    %c0_3 = arith.constant 0 : index
    %4 = vector.load %arg2[%c0_2, %c0_3] : memref<36x128xbf16, #tpu.memory_space<vmem>>, vector<36x128xbf16>
    %cst = arith.constant dense<0.000000e+00> : vector<256x128xf32>
    %5 = tpu.matmul %3, %4, %cst {dimension_numbers = #tpu.dot_dimension_numbers<[1], [0], [0], [1], [0, 0, 1, 1], [], []>} : vector<256x36xbf16>, vector<36x128xbf16>, vector<256x128xf32> -> vector<256x128xf32>
    %c0_4 = arith.constant 0 : index
    %c0_5 = arith.constant 0 : index
    %6 = vector.load %arg3[%c0_4, %c0_5] : memref<1x128xf32, #tpu.memory_space<vmem>>, vector<1x128xf32>
    %cst_6 = arith.constant dense<0.000000e+00> : vector<128xf32>
    %7 = vector.multi_reduction <add>, %5, %cst_6 [0] : vector<256x128xf32> to vector<128xf32>
    %8 = vector.shape_cast %7 : vector<128xf32> to vector<1x128xf32>
    %9 = arith.addf %6, %8 : vector<1x128xf32>
    %c0_7 = arith.constant 0 : index
    %c0_8 = arith.constant 0 : index
    %10 = vector.load %arg3[%c0_7, %c0_8] : memref<1x128xf32, #tpu.memory_space<vmem>>, vector<1x128xf32>
    tpu.vector_store %arg3[%c0_7, %c0_8], %9 {strides = array<i32>} : memref<1x128xf32, #tpu.memory_space<vmem>>, vector<1x128xf32>,
    %c0_9 = arith.constant 0 : index
    %c0_10 = arith.constant 0 : index
    %11 = vector.load %arg4[%c0_9, %c0_10] : memref<1x128xf32, #tpu.memory_space<vmem>>, vector<1x128xf32>
    %12 = arith.mulf %5, %5 : vector<256x128xf32>
    %cst_11 = arith.constant dense<0.000000e+00> : vector<128xf32>
    %13 = vector.multi_reduction <add>, %12, %cst_11 [0] : vector<256x128xf32> to vector<128xf32>
    %14 = vector.shape_cast %13 : vector<128xf32> to vector<1x128xf32>
    %15 = arith.addf %11, %14 : vector<1x128xf32>
    %c0_12 = arith.constant 0 : index
    %c0_13 = arith.constant 0 : index
    %16 = vector.load %arg4[%c0_12, %c0_13] : memref<1x128xf32, #tpu.memory_space<vmem>>, vector<1x128xf32>
    tpu.vector_store %arg4[%c0_12, %c0_13], %15 {strides = array<i32>} : memref<1x128xf32, #tpu.memory_space<vmem>>, vector<1x128xf32>,
    return
  }
  func.func @transform_0(%arg0: i32) -> (i32, i32) {
    %c0_i32 = arith.constant 0 : i32
    %c0_i32_0 = arith.constant 0 : i32
    return %arg0, %c0_i32 : i32, i32
  }
  func.func @transform_1(%arg0: i32) -> (i32, i32) {
    %c0_i32 = arith.constant 0 : i32
    %c0_i32_0 = arith.constant 0 : i32
    %c0_i32_1 = arith.constant 0 : i32
    return %c0_i32, %c0_i32_0 : i32, i32
  }
  func.func @transform_2(%arg0: i32) -> (i32, i32) {
    %c0_i32 = arith.constant 0 : i32
    %c0_i32_0 = arith.constant 0 : i32
    %c0_i32_1 = arith.constant 0 : i32
    return %c0_i32, %c0_i32_0 : i32, i32
  }
  func.func @transform_3(%arg0: i32) -> (i32, i32) {
    %c0_i32 = arith.constant 0 : i32
    %c0_i32_0 = arith.constant 0 : i32
    %c0_i32_1 = arith.constant 0 : i32
    return %c0_i32, %c0_i32_0 : i32, i32
  }
}

</mosaic_0001>

<llo_original>
// kernel: tpu_custom_call.1
$region0: #{tpu_custom_call.1}
  #allocation0 [shape = 'u32[]', space=smem, size = 0x4, offset = 0x4, fixed_abs, tag = 'smem constant byte address 0x4 - core index']
  #allocation1 [shape = 'u32[72,128]{1,0:T(1,128)}', space=vmem, size = 0x9000, scoped, tag = 'internal scratch']
  %s0 = inlined_call_operand.vmem [shape: bf16[512,36], index: 0, kind: input, shape index: {}]
  %s1 = inlined_call_operand.vmem [shape: bf16[36,128], index: 1, kind: input, shape index: {}]
  %s2 = inlined_call_operand.hbm [shape: f32[1,128], index: 2, kind: output, shape index: {0}]
  %s3 = inlined_call_operand.hbm [shape: f32[1,128], index: 3, kind: output, shape index: {1}]
  %4 = xla_tuple %s2, %s3
  %s5 = sld [smem:[#allocation0]]
  $region53: #{tpu_custom_call.1} parent=0
    _
  %s7 = ssub.s32 1, %s5
  %s8 = scalar_select 0, %s7, %s5
  $region1: #{tpu_custom_call.1} parent=0
    #allocation2 [shape = 'u8[512]{0}', space=vmem, size = 0x400, scoped, tag = 'output window, operand 0, single buffered']
    #allocation3 [shape = 's32[2]{0}', space=sflag, size = 0x8, scoped, tag = 'scoped memory for tpu_custom_call.1']
    #allocation4 [shape = 'u8[512]{0}', space=vmem, size = 0x400, scoped, tag = 'output window, operand 1, single buffered']
    #allocation5 [shape = 's32[1]{0}', space=sflag, size = 0x4, scoped, tag = 'scoped memory for tpu_custom_call.1']
    %9 = vsyncpa [#allocation3], 0
    %10 = vsyncpa [#allocation5], 0
    loop: start=0, step=1, limit=4
    $region2: #{tpu_custom_call.1} parent=1 // loop_pre_header
      _
    $region3: #{tpu_custom_call.1} parent=1 // loop_header
      %s12 = sphi 0, %s16
      %p13 = scmp.ge.s32.totalorder %s12, 4
      %s22 = sphi 0, %s24
      %s25 = sphi 0, %s22
      %s26 = sphi 0, %s25
      %s42 = sphi 0, %s26
      %s46 = sphi 0, %s46
      %s48 = sphi 0, %s46
      %s49 = sphi 0, %s48
      %s63 = sphi 0, %s49
      %s67 = sphi 0, %s67
      %s69 = sphi 0, %s67
      %s70 = sphi 0, %s69
      %s84 = sphi 0, %s70
      %s88 = sphi 0, %s88
      %s90 = sphi 0, %s88
      %s91 = sphi 0, %s90
      %s105 = sphi 0, %s91
    $region4: #{tpu_custom_call.1} parent=1 // loop_header_branch
      %15 = sbr.rel (%p13) target = $region8
    $region5: #{tpu_custom_call.1} parent=1 // loop_body
      %s17 = ssub.s32 %s12, 1
      %s18 = ssub.s32 %s12, 2
      %s19 = sadd.s32 %s12, 1
      %s20 = ssub.s32 %s12, %s19
      %p21 = scmp.eq.s32.totalorder %s20, 0
      %s23 = sadd.s32 %s22, 1
      %s24 = scalar_select %p21, %s22, %s23
      %p27 = pneg %p21
      %p28 = scmp.eq.s32.totalorder %s12, 1
      %p29 = por %p27, %p28
      %p30 = scmp.ne.s32.totalorder %s22, %s25
      %p31 = scmp.eq.s32.totalorder %s12, 0
      %p32 = por %p30, %p31
      %p33 = scmp.ne.s32.totalorder %s22, %s25
      %p34 = scmp.eq.s32.totalorder %s17, 1
      %p35 = por %p33, %p34
      %p36 = scmp.ne.s32.totalorder %s25, %s26
      %p37 = scmp.eq.s32.totalorder %s17, 0
      %p38 = por %p36, %p37
      %p39 = scmp.ne.s32.totalorder %s25, %s26
      %p40 = scmp.eq.s32.totalorder %s18, 1
      %p41 = por %p39, %p40
      %p43 = scmp.ne.s32.totalorder %s26, %s42
      %p44 = scmp.eq.s32.totalorder %s18, 0
      %p45 = por %p43, %p44
      %s47 = sadd.s32 %s46, 1
      %p50 = scmp.eq.s32.totalorder %s12, 1
      %p51 = scmp.ne.s32.totalorder %s46, %s48
      %p52 = scmp.eq.s32.totalorder %s12, 0
      %p53 = por %p51, %p52
      %p54 = scmp.ne.s32.totalorder %s46, %s48
      %p55 = scmp.eq.s32.totalorder %s17, 1
      %p56 = por %p54, %p55
      %p57 = scmp.ne.s32.totalorder %s48, %s49
      %p58 = scmp.eq.s32.totalorder %s17, 0
      %p59 = por %p57, %p58
      %p60 = scmp.ne.s32.totalorder %s48, %s49
      %p61 = scmp.eq.s32.totalorder %s18, 1
      %p62 = por %p60, %p61
      %p64 = scmp.ne.s32.totalorder %s49, %s63
      %p65 = scmp.eq.s32.totalorder %s18, 0
      %p66 = por %p64, %p65
      %s68 = sadd.s32 %s67, 1
      %p71 = scmp.eq.s32.totalorder %s12, 1
      %p72 = scmp.ne.s32.totalorder %s67, %s69
      %p73 = scmp.eq.s32.totalorder %s12, 0
      %p74 = por %p72, %p73
      %p75 = scmp.ne.s32.totalorder %s67, %s69
      %p76 = scmp.eq.s32.totalorder %s17, 1
      %p77 = por %p75, %p76
      %p78 = scmp.ne.s32.totalorder %s69, %s70
      %p79 = scmp.eq.s32.totalorder %s17, 0
      %p80 = por %p78, %p79
      %p81 = scmp.ne.s32.totalorder %s69, %s70
      %p82 = scmp.eq.s32.totalorder %s18, 1
      %p83 = por %p81, %p82
      %p85 = scmp.ne.s32.totalorder %s70, %s84
      %p86 = scmp.eq.s32.totalorder %s18, 0
      %p87 = por %p85, %p86
      %s89 = sadd.s32 %s88, 1
      %p92 = scmp.eq.s32.totalorder %s12, 1
      %p93 = scmp.ne.s32.totalorder %s88, %s90
      %p94 = scmp.eq.s32.totalorder %s12, 0
      %p95 = por %p93, %p94
      %p96 = scmp.ne.s32.totalorder %s88, %s90
      %p97 = scmp.eq.s32.totalorder %s17, 1
      %p98 = por %p96, %p97
      %p99 = scmp.ne.s32.totalorder %s90, %s91
      %p100 = scmp.eq.s32.totalorder %s17, 0
      %p101 = por %p99, %p100
      %p102 = scmp.ne.s32.totalorder %s90, %s91
      %p103 = scmp.eq.s32.totalorder %s18, 1
      %p104 = por %p102, %p103
      %p106 = scmp.ne.s32.totalorder %s91, %s105
      %p107 = scmp.eq.s32.totalorder %s18, 0
      %p108 = por %p106, %p107
      %p109 = scmp.le.s32.totalorder 1, %s12
      %p110 = scmp.lt.s32.totalorder %s12, 3
      %p111 = pnand %p109, %p110
      %p112 = pneg %p111
      // Predicated region
      $region9: #{tpu_custom_call.1} parent=5 // pred_check
        _
      $region10: #{tpu_custom_call.1} parent=5 // pred_check_branch
        %114 = sbr.rel (%p111) target = $region12
      $region11: #{tpu_custom_call.1} parent=5 // pred_region
        %s115 = ssub.s32 %s12, 1
        // Predicated region
        $region13: #{tpu_custom_call.1} parent=11 // pred_check
          %p116 = pneg %p59
        $region14: #{tpu_custom_call.1} parent=11 // pred_check_branch
          %118 = sbr.rel (%p116) target = $region16
        $region15: #{tpu_custom_call.1} parent=11 // pred_region
          _
        $region16: #{tpu_custom_call.1} parent=11 // pred_fallthru
          _
      $region12: #{tpu_custom_call.1} parent=5 // pred_fallthru
        _
      %p119 = scmp.lt.s32.totalorder %s12, 2
      // Predicated region
      $region17: #{tpu_custom_call.1} parent=5 // pred_check
        %p120 = pneg %p119
      $region18: #{tpu_custom_call.1} parent=5 // pred_check_branch
        %122 = sbr.rel (%p120) target = $region20
      $region19: #{tpu_custom_call.1} parent=5 // pred_region
        // Predicated region
        $region21: #{tpu_custom_call.1} parent=19 // pred_check
          %p123 = pneg %p32
        $region22: #{tpu_custom_call.1} parent=19 // pred_check_branch
          %125 = sbr.rel (%p123) target = $region24
        $region23: #{tpu_custom_call.1} parent=19 // pred_region
          %s126 = smul.u32 32, %s12
          %p127 = scmp.lt.s32.totalorder %s126, 63
          %s128 = scalar_select %p127, %s126, 63
          %s129 = smul.addr %s128, 4
          %s130 = scalar_lea.vmem %s0, %s129
          %s131 = smul.u32 32, %s12
        $region24: #{tpu_custom_call.1} parent=19 // pred_fallthru
          _
      $region20: #{tpu_custom_call.1} parent=5 // pred_fallthru
        _
      %p132 = scmp.le.s32.totalorder 1, %s12
      %p133 = scmp.lt.s32.totalorder %s12, 3
      %p134 = pnand %p132, %p133
      %p135 = pneg %p134
      // Predicated region
      $region25: #{tpu_custom_call.1} parent=5 // pred_check
        _
      $region26: #{tpu_custom_call.1} parent=5 // pred_check_branch
        %137 = sbr.rel (%p134) target = $region28
      $region27: #{tpu_custom_call.1} parent=5 // pred_region
        %s138 = ssub.s32 %s12, 1
        %s139 = smul.u32 32, %s17
        %p140 = scmp.lt.s32.totalorder %s139, 63
        %s141 = scalar_select %p140, %s139, 63
        %s142 = smul.addr %s141, 4
        %s143 = scalar_lea.vmem %s0, %s142
        %p144 = pneg %p38
        %p145 = pneg %p35
        %p146 = pneg %p59
        %p147 = pneg %p56
        %p148 = pneg %p80
        %p149 = pneg %p77
        %p150 = pneg %p101
        %p151 = pneg %p98
        %s152 = smul.u32 32, %s17
        %p153 = scmp.lt.s32.totalorder %s152, 63
        %s154 = scalar_select %p153, %s152, 63
        %s155 = smul.addr %s154, 4
        %s156 = scalar_lea.vmem %s0, %s155
        %s157 = smul.u32 32, %s17
        %p159 = scmp.eq.s32.totalorder %s17, 0
        // Predicated region
        $region29: #{tpu_custom_call.1} parent=27 // pred_check
          %p160 = pneg %p159
        $region30: #{tpu_custom_call.1} parent=27 // pred_check_branch
          %162 = sbr.rel (%p160) target = $region32
        $region31: #{tpu_custom_call.1} parent=27 // pred_region
          %163 = vst [vmem:[#allocation2] sm:$0x1] 0.0
          %164 = vst [vmem:[#allocation4] sm:$0x1] 0.0
        $region32: #{tpu_custom_call.1} parent=27 // pred_fallthru
          _
        %v165 = vld [vmem:[%s156] sm:$0xf]
        %v166 = vld [vmem:[%s156 + $0x4] sm:$0xf]
        %v167 = vld [vmem:[%s156 + $0x8] sm:$0xf]
        %v168 = vld [vmem:[%s156 + $0xc] sm:$0xf]
        %v169 = vld [vmem:[%s156 + $0x10] sm:$0xf]
        %v170 = vld [vmem:[%s156 + $0x14] sm:$0xf]
        %v171 = vld [vmem:[%s156 + $0x18] sm:$0xf]
        %v172 = vld [vmem:[%s156 + $0x1c] sm:$0xf]
        %v173 = vld [vmem:[%s156 + $0x20] sm:$0xf]
        %v174 = vld [vmem:[%s156 + $0x24] sm:$0xf]
        %v175 = vld [vmem:[%s156 + $0x28] sm:$0xf]
        %v176 = vld [vmem:[%s156 + $0x2c] sm:$0xf]
        %v177 = vld [vmem:[%s156 + $0x30] sm:$0xf]
        %v178 = vld [vmem:[%s156 + $0x34] sm:$0xf]
        %v179 = vld [vmem:[%s156 + $0x38] sm:$0xf]
        %v180 = vld [vmem:[%s156 + $0x3c] sm:$0xf]
        %v181 = vld [vmem:[%s156 + $0x40] sm:$0xf]
        %v182 = vld [vmem:[%s156 + $0x44] sm:$0xf]
        %v183 = vld [vmem:[%s156 + $0x48] sm:$0xf]
        %v184 = vld [vmem:[%s156 + $0x4c] sm:$0xf]
        %v185 = vld [vmem:[%s156 + $0x50] sm:$0xf]
        %v186 = vld [vmem:[%s156 + $0x54] sm:$0xf]
        %v187 = vld [vmem:[%s156 + $0x58] sm:$0xf]
        %v188 = vld [vmem:[%s156 + $0x5c] sm:$0xf]
        %v189 = vld [vmem:[%s156 + $0x60] sm:$0xf]
        %v190 = vld [vmem:[%s156 + $0x64] sm:$0xf]
        %v191 = vld [vmem:[%s156 + $0x68] sm:$0xf]
        %v192 = vld [vmem:[%s156 + $0x6c] sm:$0xf]
        %v193 = vld [vmem:[%s156 + $0x70] sm:$0xf]
        %v194 = vld [vmem:[%s156 + $0x74] sm:$0xf]
        %v195 = vld [vmem:[%s156 + $0x78] sm:$0xf]
        %v196 = vld [vmem:[%s156 + $0x7c] sm:$0xf]
        %v197 = vld [vmem:[%s1] sm:$0xf]
        %v198 = vld [vmem:[%s1 + $0x4] sm:$0xf]
        %v199 = vld [vmem:[%s1 + $0x8] sm:$0xf]
        %v200 = vld [vmem:[%s1 + $0xc] sm:$0xf]
        %v201 = vld [vmem:[%s1 + $0x10] sm:$0x3]
        %v234 = vunpack.c.l.b16 %v165
        %v235 = vunpack.c.l.b16 %v166
        %v236 = vunpack.c.l.b16 %v167
        %v237 = vunpack.c.l.b16 %v168
        %v238 = vunpack.c.l.b16 %v169
        %v239 = vunpack.c.l.b16 %v170
        %v240 = vunpack.c.l.b16 %v171
        %v241 = vunpack.c.l.b16 %v172
        %v242 = vunpack.c.l.b16 %v173
        %v243 = vunpack.c.l.b16 %v174
        %v244 = vunpack.c.l.b16 %v175
        %v245 = vunpack.c.l.b16 %v176
        %v246 = vunpack.c.l.b16 %v177
        %v247 = vunpack.c.l.b16 %v178
        %v248 = vunpack.c.l.b16 %v179
        %v249 = vunpack.c.l.b16 %v180
        %v250 = vunpack.c.l.b16 %v181
        %v251 = vunpack.c.l.b16 %v182
        %v252 = vunpack.c.l.b16 %v183
        %v253 = vunpack.c.l.b16 %v184
        %v254 = vunpack.c.l.b16 %v185
        %v255 = vunpack.c.l.b16 %v186
        %v256 = vunpack.c.l.b16 %v187
        %v257 = vunpack.c.l.b16 %v188
        %v258 = vunpack.c.l.b16 %v189
        %v259 = vunpack.c.l.b16 %v190
        %v260 = vunpack.c.l.b16 %v191
        %v261 = vunpack.c.l.b16 %v192
        %v262 = vunpack.c.l.b16 %v193
        %v263 = vunpack.c.l.b16 %v194
        %v264 = vunpack.c.l.b16 %v195
        %v265 = vunpack.c.l.b16 %v196
        %v266 = vpack.c.b16 %v235, %v234
        %v267 = vpack.c.b16 %v237, %v236
        %v268 = vpack.c.b16 %v239, %v238
        %v269 = vpack.c.b16 %v241, %v240
        %v270 = vpack.c.b16 %v243, %v242
        %v271 = vpack.c.b16 %v245, %v244
        %v272 = vpack.c.b16 %v247, %v246
        %v273 = vpack.c.b16 %v249, %v248
        %v274 = vpack.c.b16 %v251, %v250
        %v275 = vpack.c.b16 %v253, %v252
        %v276 = vpack.c.b16 %v255, %v254
        %v277 = vpack.c.b16 %v257, %v256
        %v278 = vpack.c.b16 %v259, %v258
        %v279 = vpack.c.b16 %v261, %v260
        %v280 = vpack.c.b16 %v263, %v262
        %v281 = vpack.c.b16 %v265, %v264
        %v287 = vunpack.c.l.b16 %v197
        %v288 = vunpack.c.l.b16 %v198
        %v289 = vunpack.c.l.b16 %v199
        %v290 = vunpack.c.l.b16 %v200
        %v291 = vunpack.c.l.b16 %v201
        %v292 = vpack.c.b16 %v288, %v287
        %v293 = vpack.c.b16 %v290, %v289
        %v294 = vpack.c.b16 %v291, %v291
        %vm297 = vcmask 293888
        %v299 = vsel %vm297, %v266, 0
        %v302 = vsel %vm297, %v267, 0
        %v305 = vsel %vm297, %v268, 0
        %v308 = vsel %vm297, %v269, 0
        %v311 = vsel %vm297, %v270, 0
        %v314 = vsel %vm297, %v271, 0
        %v317 = vsel %vm297, %v272, 0
        %v320 = vsel %vm297, %v273, 0
        %v323 = vsel %vm297, %v274, 0
        %v326 = vsel %vm297, %v275, 0
        %v329 = vsel %vm297, %v276, 0
        %v332 = vsel %vm297, %v277, 0
        %v335 = vsel %vm297, %v278, 0
        %v338 = vsel %vm297, %v279, 0
        %v341 = vsel %vm297, %v280, 0
        %v344 = vsel %vm297, %v281, 0
        %vm346 = vcmask 1041408
        %v348 = vsel %vm346, %v294, 0
        %350 = vmatpush.bf16.msra.mxu0 0
        %351 = vmatpush.bf16.msra.mxu0 0
        %352 = vmatpush.bf16.msra.mxu0 0
        %353 = vmatpush.bf16.msra.mxu0 0
        %354 = vmatpush.bf16.msra.mxu0 0
        %355 = vmatpush.bf16.msra.mxu0 %v348
        %356 = vmatpush.bf16.msra.mxu0 %v293
        %357 = vmatpush.bf16.msra.mxu0 %v292
        %358 = vmatmul.bf16.gmra.mxu0 %v299
        %v359 = vpop.f32.mrf.mxu0
        %v360 = vadd.f32 0.0, %v359
        %v361 = vpop.f32.mrf.mxu0
        %v362 = vadd.f32 0.0, %v361
        %363 = vmatmul.bf16.gmra.mxu0 %v302
        %v364 = vpop.f32.mrf.mxu0
        %v365 = vadd.f32 0.0, %v364
        %v366 = vpop.f32.mrf.mxu0
        %v367 = vadd.f32 0.0, %v366
        %368 = vmatmul.bf16.gmra.mxu0 %v305
        %v369 = vpop.f32.mrf.mxu0
        %v370 = vadd.f32 0.0, %v369
        %v371 = vpop.f32.mrf.mxu0
        %v372 = vadd.f32 0.0, %v371
        %373 = vmatmul.bf16.gmra.mxu0 %v308
        %v374 = vpop.f32.mrf.mxu0
        %v375 = vadd.f32 0.0, %v374
        %v376 = vpop.f32.mrf.mxu0
        %v377 = vadd.f32 0.0, %v376
        %378 = vmatmul.bf16.gmra.mxu0 %v311
        %v379 = vpop.f32.mrf.mxu0
        %v380 = vadd.f32 0.0, %v379
        %v381 = vpop.f32.mrf.mxu0
        %v382 = vadd.f32 0.0, %v381
        %383 = vmatmul.bf16.gmra.mxu0 %v314
        %v384 = vpop.f32.mrf.mxu0
        %v385 = vadd.f32 0.0, %v384
        %v386 = vpop.f32.mrf.mxu0
        %v387 = vadd.f32 0.0, %v386
        %388 = vmatmul.bf16.gmra.mxu0 %v317
        %v389 = vpop.f32.mrf.mxu0
        %v390 = vadd.f32 0.0, %v389
        %v391 = vpop.f32.mrf.mxu0
        %v392 = vadd.f32 0.0, %v391
        %393 = vmatmul.bf16.gmra.mxu0 %v320
        %v394 = vpop.f32.mrf.mxu0
        %v395 = vadd.f32 0.0, %v394
        %v396 = vpop.f32.mrf.mxu0
        %v397 = vadd.f32 0.0, %v396
        %398 = vmatmul.bf16.gmra.mxu0 %v323
        %v399 = vpop.f32.mrf.mxu0
        %v400 = vadd.f32 0.0, %v399
        %v401 = vpop.f32.mrf.mxu0
        %v402 = vadd.f32 0.0, %v401
        %403 = vmatmul.bf16.gmra.mxu0 %v326
        %v404 = vpop.f32.mrf.mxu0
        %v405 = vadd.f32 0.0, %v404
        %v406 = vpop.f32.mrf.mxu0
        %v407 = vadd.f32 0.0, %v406
        %408 = vmatmul.bf16.gmra.mxu0 %v329
        %v409 = vpop.f32.mrf.mxu0
        %v410 = vadd.f32 0.0, %v409
        %v411 = vpop.f32.mrf.mxu0
        %v412 = vadd.f32 0.0, %v411
        %413 = vmatmul.bf16.gmra.mxu0 %v332
        %v414 = vpop.f32.mrf.mxu0
        %v415 = vadd.f32 0.0, %v414
        %v416 = vpop.f32.mrf.mxu0
        %v417 = vadd.f32 0.0, %v416
        %418 = vmatmul.bf16.gmra.mxu0 %v335
        %v419 = vpop.f32.mrf.mxu0
        %v420 = vadd.f32 0.0, %v419
        %v421 = vpop.f32.mrf.mxu0
        %v422 = vadd.f32 0.0, %v421
        %423 = vmatmul.bf16.gmra.mxu0 %v338
        %v424 = vpop.f32.mrf.mxu0
        %v425 = vadd.f32 0.0, %v424
        %v426 = vpop.f32.mrf.mxu0
        %v427 = vadd.f32 0.0, %v426
        %428 = vmatmul.bf16.gmra.mxu0 %v341
        %v429 = vpop.f32.mrf.mxu0
        %v430 = vadd.f32 0.0, %v429
        %v431 = vpop.f32.mrf.mxu0
        %v432 = vadd.f32 0.0, %v431
        %433 = vmatmul.bf16.gmra.mxu0 %v344
        %v434 = vpop.f32.mrf.mxu0
        %v435 = vadd.f32 0.0, %v434
        %v436 = vpop.f32.mrf.mxu0
        %v437 = vadd.f32 0.0, %v436
        %438 = vdwg.mxu0
        %v439 = vld [vmem:[#allocation2] sm:$0x1]
        %v440 = vadd.f32 %v360, %v362
        %v441 = vadd.f32 %v440, %v365
        %v442 = vadd.f32 %v441, %v367
        %v443 = vadd.f32 %v442, %v370
        %v444 = vadd.f32 %v443, %v372
        %v445 = vadd.f32 %v444, %v375
        %v446 = vadd.f32 %v445, %v377
        %v447 = vadd.f32 %v446, %v380
        %v448 = vadd.f32 %v447, %v382
        %v449 = vadd.f32 %v448, %v385
        %v450 = vadd.f32 %v449, %v387
        %v451 = vadd.f32 %v450, %v390
        %v452 = vadd.f32 %v451, %v392
        %v453 = vadd.f32 %v452, %v395
        %v454 = vadd.f32 %v453, %v397
        %v455 = vadd.f32 %v454, %v400
        %v456 = vadd.f32 %v455, %v402
        %v457 = vadd.f32 %v456, %v405
        %v458 = vadd.f32 %v457, %v407
        %v459 = vadd.f32 %v458, %v410
        %v460 = vadd.f32 %v459, %v412
        %v461 = vadd.f32 %v460, %v415
        %v462 = vadd.f32 %v461, %v417
        %v463 = vadd.f32 %v462, %v420
        %v464 = vadd.f32 %v463, %v422
        %v465 = vadd.f32 %v464, %v425
        %v466 = vadd.f32 %v465, %v427
        %v467 = vadd.f32 %v466, %v430
        %v468 = vadd.f32 %v467, %v432
        %v469 = vadd.f32 %v468, %v435
        %v470 = vadd.f32 %v469, %v437
        %v471 = vrot.slane %v470, 4
        %v472 = vadd.f32 %v470, %v471
        %v473 = vrot.slane %v472, 2
        %v474 = vadd.f32 %v472, %v473
        %v475 = vrot.slane %v474, 1
        %v476 = vadd.f32 %v474, %v475
        %v477 = vadd.f32 %v439, %v476
        %478 = vst [vmem:[#allocation2] sm:$0x1] %v477
        %v479 = vld [vmem:[#allocation4] sm:$0x1]
        %v480 = vmul.f32 %v360, %v360
        %v481 = vmul.f32 %v362, %v362
        %v482 = vmul.f32 %v365, %v365
        %v483 = vmul.f32 %v367, %v367
        %v484 = vmul.f32 %v370, %v370
        %v485 = vmul.f32 %v372, %v372
        %v486 = vmul.f32 %v375, %v375
        %v487 = vmul.f32 %v377, %v377
        %v488 = vmul.f32 %v380, %v380
        %v489 = vmul.f32 %v382, %v382
        %v490 = vmul.f32 %v385, %v385
        %v491 = vmul.f32 %v387, %v387
        %v492 = vmul.f32 %v390, %v390
        %v493 = vmul.f32 %v392, %v392
        %v494 = vmul.f32 %v395, %v395
        %v495 = vmul.f32 %v397, %v397
        %v496 = vmul.f32 %v400, %v400
        %v497 = vmul.f32 %v402, %v402
        %v498 = vmul.f32 %v405, %v405
        %v499 = vmul.f32 %v407, %v407
        %v500 = vmul.f32 %v410, %v410
        %v501 = vmul.f32 %v412, %v412
        %v502 = vmul.f32 %v415, %v415
        %v503 = vmul.f32 %v417, %v417
        %v504 = vmul.f32 %v420, %v420
        %v505 = vmul.f32 %v422, %v422
        %v506 = vmul.f32 %v425, %v425
        %v507 = vmul.f32 %v427, %v427
        %v508 = vmul.f32 %v430, %v430
        %v509 = vmul.f32 %v432, %v432
        %v510 = vmul.f32 %v435, %v435
        %v511 = vmul.f32 %v437, %v437
        %v512 = vadd.f32 %v480, %v481
        %v513 = vadd.f32 %v512, %v482
        %v514 = vadd.f32 %v513, %v483
        %v515 = vadd.f32 %v514, %v484
        %v516 = vadd.f32 %v515, %v485
        %v517 = vadd.f32 %v516, %v486
        %v518 = vadd.f32 %v517, %v487
        %v519 = vadd.f32 %v518, %v488
        %v520 = vadd.f32 %v519, %v489
        %v521 = vadd.f32 %v520, %v490
        %v522 = vadd.f32 %v521, %v491
        %v523 = vadd.f32 %v522, %v492
        %v524 = vadd.f32 %v523, %v493
        %v525 = vadd.f32 %v524, %v494
        %v526 = vadd.f32 %v525, %v495
        %v527 = vadd.f32 %v526, %v496
        %v528 = vadd.f32 %v527, %v497
        %v529 = vadd.f32 %v528, %v498
        %v530 = vadd.f32 %v529, %v499
        %v531 = vadd.f32 %v530, %v500
        %v532 = vadd.f32 %v531, %v501
        %v533 = vadd.f32 %v532, %v502
        %v534 = vadd.f32 %v533, %v503
        %v535 = vadd.f32 %v534, %v504
        %v536 = vadd.f32 %v535, %v505
        %v537 = vadd.f32 %v536, %v506
        %v538 = vadd.f32 %v537, %v507
        %v539 = vadd.f32 %v538, %v508
        %v540 = vadd.f32 %v539, %v509
        %v541 = vadd.f32 %v540, %v510
        %v542 = vadd.f32 %v541, %v511
        %v543 = vrot.slane %v542, 4
        %v544 = vadd.f32 %v542, %v543
        %v545 = vrot.slane %v544, 2
        %v546 = vadd.f32 %v544, %v545
        %v547 = vrot.slane %v546, 1
        %v548 = vadd.f32 %v546, %v547
        %v549 = vadd.f32 %v479, %v548
        %550 = vst [vmem:[#allocation4] sm:$0x1] %v549
        // Predicated region
        $region33: #{tpu_custom_call.1} parent=27 // pred_check
          %p551 = pneg %p77
        $region34: #{tpu_custom_call.1} parent=27 // pred_check_branch
          %553 = sbr.rel (%p551) target = $region36
        $region35: #{tpu_custom_call.1} parent=27 // pred_region
          %555 = vsyncadd [#allocation3], 0
          %s557 = sshll.u32 [#allocation2], 4
          %s558 = int_to_ptr.vmem [resolvable:$true] %s557
          %s559 = sshll.u32 %s2, 4
          %s560 = int_to_ptr.hbm [resolvable:$true] %s559
          %562 = dma.vmem_to_hbm [thread:$0]  %s558, 16, %s560, [#allocation3]
        $region36: #{tpu_custom_call.1} parent=27 // pred_fallthru
          _
        // Predicated region
        $region37: #{tpu_custom_call.1} parent=27 // pred_check
          %p563 = pneg %p98
        $region38: #{tpu_custom_call.1} parent=27 // pred_check_branch
          %565 = sbr.rel (%p563) target = $region40
        $region39: #{tpu_custom_call.1} parent=27 // pred_region
          %567 = vsyncadd [#allocation5], 0
          %s569 = sshll.u32 [#allocation4], 4
          %s570 = int_to_ptr.vmem [resolvable:$true] %s569
          %s571 = sshll.u32 %s3, 4
          %s572 = int_to_ptr.hbm [resolvable:$true] %s571
          %574 = dma.vmem_to_hbm [thread:$0]  %s570, 16, %s572, [#allocation5]
        $region40: #{tpu_custom_call.1} parent=27 // pred_fallthru
          _
        // Predicated region
        $region41: #{tpu_custom_call.1} parent=27 // pred_check
          %p575 = pneg %p77
        $region42: #{tpu_custom_call.1} parent=27 // pred_check_branch
          %577 = sbr.rel (%p575) target = $region44
        $region43: #{tpu_custom_call.1} parent=27 // pred_region
          %579 = dma.done [#allocation3], 16
        $region44: #{tpu_custom_call.1} parent=27 // pred_fallthru
          _
        // Predicated region
        $region45: #{tpu_custom_call.1} parent=27 // pred_check
          %p580 = pneg %p98
        $region46: #{tpu_custom_call.1} parent=27 // pred_check_branch
          %582 = sbr.rel (%p580) target = $region48
        $region47: #{tpu_custom_call.1} parent=27 // pred_region
          %584 = dma.done [#allocation5], 16
        $region48: #{tpu_custom_call.1} parent=27 // pred_fallthru
          _
      $region28: #{tpu_custom_call.1} parent=5 // pred_fallthru
        _
      %p585 = scmp.le.s32.totalorder 2, %s12
      // Predicated region
      $region49: #{tpu_custom_call.1} parent=5 // pred_check
        %p586 = pneg %p585
      $region50: #{tpu_custom_call.1} parent=5 // pred_check_branch
        %588 = sbr.rel (%p586) target = $region52
      $region51: #{tpu_custom_call.1} parent=5 // pred_region
        %s589 = ssub.s32 %s12, 2
      $region52: #{tpu_custom_call.1} parent=5 // pred_fallthru
        _
    $region6: #{tpu_custom_call.1} parent=1 // loop_footer
      %s16 = sadd.s32 1, %s12
    $region7: #{tpu_custom_call.1} parent=1 // loop_footer_branch
      %11 = sbr.rel target = $region3
    $region8: #{tpu_custom_call.1} parent=1 // loop_exit
      _
    %590 = vsyncpa [#allocation3], 1
    %s591 = scalar_lea.sflag [#allocation3], 1
    %592 = vsyncpa %s591, 1
    %593 = vsyncpa [#allocation5], 1

</llo_original>
